<compile_context>
chip_gen: v6e
topology: v6e:2x2x1
jax: 0.10.0
libtpu: 0.0.40
codegen_flags: <defaults>
</compile_context>

<pallas_src>
import jax
import jax.numpy as jnp
from jax.experimental import pallas as pl
from jax.experimental.pallas import tpu as pltpu


def _round_up(n: int, m: int) -> int:
    return ((n + m - 1) // m) * m


def decoder_kernel(x_ref, h_ref, wih_ref, whh_ref, bg_ref, bhn_ref,
                   w1_ref, b1_ref, w2_ref, b2_ref,
                   y_ref, hnew_ref):
    """One GRU step + relu(Linear) + Linear, fused, lane-padded layout."""
    Hp = hnew_ref.shape[-1]                       # padded hidden (multiple of 128)

    h_f32 = h_ref[...]                            # (TB, Hp) f32 carried state
    x_bf = x_ref[...].astype(jnp.bfloat16)
    h_bf = h_f32.astype(jnp.bfloat16)

    # GRU gate pre-activations (PyTorch gate order r, z, n); every gate band
    # is 128-lane aligned.  bg already holds [b_ih_r+b_hh_r | b_ih_z+b_hh_z | b_ih_n].
    gi = jnp.dot(x_bf, wih_ref[...], preferred_element_type=jnp.float32) + bg_ref[...]
    gh = jnp.dot(h_bf, whh_ref[...], preferred_element_type=jnp.float32)

    i_r, i_z, i_n = gi[:, :Hp], gi[:, Hp:2 * Hp], gi[:, 2 * Hp:]
    h_r, h_z, h_n = gh[:, :Hp], gh[:, Hp:2 * Hp], gh[:, 2 * Hp:]

    r = jax.nn.sigmoid(i_r + h_r)
    z = jax.nn.sigmoid(i_z + h_z)
    n = jnp.tanh(i_n + r * (h_n + bhn_ref[...]))  # b_hh_n inside r*(...) (PyTorch)
    h_new = (1.0 - z) * n + z * h_f32             # f32 state update
    hnew_ref[...] = h_new

    # lin1 + relu (bf16 matmul operands, f32 accumulation)
    fc1 = jnp.dot(h_new.astype(jnp.bfloat16), w1_ref[...],
                  preferred_element_type=jnp.float32) + b1_ref[...]
    fc1 = jnp.maximum(fc1, 0.0)
    # lin2 -> lane-dense (padded) output slab
    y_ref[...] = jnp.dot(fc1.astype(jnp.bfloat16), w2_ref[...],
                         preferred_element_type=jnp.float32) + b2_ref[...]


def init_params(key, input_size, hidden_size, hidden_fc, output_size):
    """Raw synthetic params mirroring nn.Module shapes (weights stored
    transposed: (in_features, out_features)); GRU gates concatenated [r,z,n]."""
    ks = jax.random.split(key, 10)
    s_gru = 1.0 / jnp.sqrt(hidden_size)
    s1 = 1.0 / jnp.sqrt(hidden_size)
    s2 = 1.0 / jnp.sqrt(hidden_fc)
    u = lambda k, shape, s: jax.random.uniform(k, shape, jnp.float32, -s, s)
    return {
        "w_ih": u(ks[0], (input_size, 3 * hidden_size), s_gru),
        "w_hh": u(ks[1], (hidden_size, 3 * hidden_size), s_gru),
        "b_ih": u(ks[2], (1, 3 * hidden_size), s_gru),
        "b_hh": u(ks[3], (1, 3 * hidden_size), s_gru),
        "w1": u(ks[4], (hidden_size, hidden_fc), s1),
        "b1": u(ks[5], (1, hidden_fc), s1),
        "w2": u(ks[6], (hidden_fc, output_size), s2),
        "b2": u(ks[7], (1, output_size), s2),
    }


def prepare_params(p, hidden_size, hidden_fc, output_size):
    """One-time re-layout: pad each gate band / FC axis to 128 lanes, cast
    weights to bf16, fold the r/z biases.  Call this outside any decode loop."""
    H, F, O = hidden_size, hidden_fc, output_size
    Hp = _round_up(H, 128)
    Fp = _round_up(F, 128)
    Op = _round_up(O, 128)

    def pad2(a, rows, cols):
        return jnp.pad(a, ((0, rows - a.shape[0]), (0, cols - a.shape[1])))

    def gates(w):                          # (in, 3H) -> 3 x (in, H)
        return [w[:, g * H:(g + 1) * H] for g in range(3)]

    I = p["w_ih"].shape[0]
    w_ih = jnp.concatenate([pad2(g, I, Hp) for g in gates(p["w_ih"])], axis=1)
    w_hh = jnp.concatenate([pad2(g, Hp, Hp) for g in gates(p["w_hh"])], axis=1)

    bih = [pad2(p["b_ih"][:, g * H:(g + 1) * H], 1, Hp) for g in range(3)]
    bhh = [pad2(p["b_hh"][:, g * H:(g + 1) * H], 1, Hp) for g in range(3)]
    b_gates = jnp.concatenate([bih[0] + bhh[0], bih[1] + bhh[1], bih[2]], axis=1)
    b_hh_n = bhh[2]

    return {
        "H": H, "O": O, "Hp": Hp, "Fp": Fp, "Op": Op,
        "w_ih": w_ih.astype(jnp.bfloat16),           # (I, 3*Hp)
        "w_hh": w_hh.astype(jnp.bfloat16),           # (Hp, 3*Hp)
        "b_gates": b_gates.astype(jnp.float32),      # (1, 3*Hp) folded r/z + b_ih_n
        "b_hh_n": b_hh_n.astype(jnp.float32),        # (1, Hp)
        "w1": pad2(p["w1"], Hp, Fp).astype(jnp.bfloat16),   # (Hp, Fp)
        "b1": pad2(p["b1"], 1, Fp).astype(jnp.float32),     # (1, Fp)
        "w2": pad2(p["w2"], Fp, Op).astype(jnp.bfloat16),   # (Fp, Op)
        "b2": pad2(p["b2"], 1, Op).astype(jnp.float32),     # (1, Op)
    }


def decoder_forward(x, h, prep, *, tile_b=None):
    """x: (B, input_size) f32; h: (1, B, hidden) f32.
    Returns (y: (B, output_size) f32, h_new: (1, B, hidden) f32)."""
    B, I = x.shape
    H, O = prep["H"], prep["O"]
    Hp, Fp, Op = prep["Hp"], prep["Fp"], prep["Op"]

    Bp = _round_up(B, 8)
    h2d = h.reshape(B, H)
    x_p = jnp.pad(x, ((0, Bp - B), (0, 0)))
    h_p = jnp.pad(h2d, ((0, Bp - B), (0, Hp - H)))

    # Small/medium batch: single grid step (each grid step is a serial loop
    # iteration costing ~0.35us).  Tile the batch only when each tile still
    # fills >=128 MXU rows; the "parallel" batch axis then also engages the
    # second v7x TensorCore.
    if tile_b is None:
        tile_b = Bp
    assert Bp % tile_b == 0
    grid = (Bp // tile_b,)

    row_map = lambda i: (i, 0)       # batch-tiled activations
    full_map = lambda i: (0, 0)      # weights / biases: same full block each step

    in_specs = [
        pl.BlockSpec((tile_b, I), row_map),      # x
        pl.BlockSpec((tile_b, Hp), row_map),     # h   (aliased with h_new output)
        pl.BlockSpec((I, 3 * Hp), full_map),     # w_ih (bf16, 128-lane gate bands)
        pl.BlockSpec((Hp, 3 * Hp), full_map),    # w_hh (bf16)
        pl.BlockSpec((1, 3 * Hp), full_map),     # folded gate bias
        pl.BlockSpec((1, Hp), full_map),         # b_hh_n
        pl.BlockSpec((Hp, Fp), full_map),        # w1 (bf16)
        pl.BlockSpec((1, Fp), full_map),         # b1
        pl.BlockSpec((Fp, Op), full_map),        # w2 (bf16)
        pl.BlockSpec((1, Op), full_map),         # b2
    ]

    y_p, h_new_p = pl.pallas_call(
        decoder_kernel,
        out_shape=(jax.ShapeDtypeStruct((Bp, Op), jnp.float32),
                   jax.ShapeDtypeStruct((Bp, Hp), jnp.float32)),
        grid_spec=pltpu.PrefetchScalarGridSpec(
            num_scalar_prefetch=0,
            grid=grid,
            in_specs=in_specs,
            out_specs=(pl.BlockSpec((tile_b, Op), row_map),
                       pl.BlockSpec((tile_b, Hp), row_map)),
        ),
        # Hidden state input (index 1) aliases hidden state output (index 1):
        # no separate HBM allocation / copy for the carried state.
        input_output_aliases={1: 1},
        compiler_params=pltpu.CompilerParams(
            dimension_semantics=("parallel",),
            # Tiny footprint here; explicit limit leaves headroom on v7x's
            # 64 MiB VMEM when hidden/hidden_fc grow (weights are constant-
            # index so they could additionally be single-buffered).
            vmem_limit_bytes=64 * 1024 * 1024,
        ),
    )(x_p, h_p,
      prep["w_ih"], prep["w_hh"], prep["b_gates"], prep["b_hh_n"],
      prep["w1"], prep["b1"], prep["w2"], prep["b2"])

    y = y_p[:B, :O]
    h_new = h_new_p[:B, :H].reshape(1, B, H)
    return y, h_new


def decoder_reference(x, h, p):
    """Pure-JAX f32 reference (PyTorch GRU semantics) for correctness check."""
    B, _ = x.shape
    H = h.shape[-1]
    h2d = h.reshape(B, H)
    gi = x @ p["w_ih"] + p["b_ih"]
    gh = h2d @ p["w_hh"] + p["b_hh"]
    i_r, i_z, i_n = gi[:, :H], gi[:, H:2 * H], gi[:, 2 * H:]
    h_r, h_z, h_n = gh[:, :H], gh[:, H:2 * H], gh[:, 2 * H:]
    r = jax.nn.sigmoid(i_r + h_r)
    z = jax.nn.sigmoid(i_z + h_z)
    n = jnp.tanh(i_n + r * h_n)
    h_new = (1.0 - z) * n + z * h2d
    y = jnp.maximum(h_new @ p["w1"] + p["b1"], 0.0) @ p["w2"] + p["b2"]
    return y, h_new.reshape(1, B, H)


if __name__ == "__main__":
    batch = 8
    input_size = 16
    hidden_size = 32
    hidden_fc = 32
    output_size = 1

    key = jax.random.PRNGKey(0)
    k_x, k_h, k_p = jax.random.split(key, 3)
    x = jax.random.normal(k_x, (batch, input_size), jnp.float32)
    h = jax.random.normal(k_h, (1, batch, hidden_size), jnp.float32)
    raw = init_params(k_p, input_size, hidden_size, hidden_fc, output_size)
    prep = prepare_params(raw, hidden_size, hidden_fc, output_size)

    y, h_new = decoder_forward(x, h, prep)
    y, h_new = jax.block_until_ready((y, h_new))

    y_ref, h_ref = decoder_reference(x, h, raw)
    assert y.shape == (batch, output_size)
    assert h_new.shape == (1, batch, hidden_size)
    # bf16 matmul operands with f32 accumulation -> loosened tolerance vs f32 ref
    assert jnp.allclose(y, y_ref, atol=2e-2, rtol=2e-2)
    assert jnp.allclose(h_new, h_ref, atol=2e-2, rtol=2e-2)

    print("KERNEL_OK")
</pallas_src>

<mosaic_0001>
module attributes {stable_mosaic.version = 11 : i64} {
  func.func @decoder_kernel(%arg0: i32, %arg1: memref<8x16xf32, #tpu.memory_space<vmem>>, %arg2: memref<8x128xf32, #tpu.memory_space<vmem>>, %arg3: memref<16x384xbf16, #tpu.memory_space<vmem>>, %arg4: memref<128x384xbf16, #tpu.memory_space<vmem>>, %arg5: memref<1x384xf32, #tpu.memory_space<vmem>>, %arg6: memref<1x128xf32, #tpu.memory_space<vmem>>, %arg7: memref<128x128xbf16, #tpu.memory_space<vmem>>, %arg8: memref<1x128xf32, #tpu.memory_space<vmem>>, %arg9: memref<128x128xbf16, #tpu.memory_space<vmem>>, %arg10: memref<1x128xf32, #tpu.memory_space<vmem>>, %arg11: memref<8x128xf32, #tpu.memory_space<vmem>>, %arg12: memref<8x128xf32, #tpu.memory_space<vmem>>) attributes {dimension_semantics = [#tpu.dimension_semantics<parallel>], iteration_bounds = array<i64: 1>, scalar_prefetch = 0 : i64, scratch_operands = 0 : i64, tpu.core_type = #tpu.core_type<tc>, window_params = [{transform_indices = @transform_0, window_bounds = array<i64: 8, 16>}, {transform_indices = @transform_1, window_bounds = array<i64: 8, 128>}, {pipeline_mode = #tpu.pipeline_mode<synchronous>, transform_indices = @transform_2, window_bounds = array<i64: 16, 384>}, {pipeline_mode = #tpu.pipeline_mode<synchronous>, transform_indices = @transform_3, window_bounds = array<i64: 128, 384>}, {pipeline_mode = #tpu.pipeline_mode<synchronous>, transform_indices = @transform_4, window_bounds = array<i64: 1, 384>}, {pipeline_mode = #tpu.pipeline_mode<synchronous>, transform_indices = @transform_5, window_bounds = array<i64: 1, 128>}, {pipeline_mode = #tpu.pipeline_mode<synchronous>, transform_indices = @transform_6, window_bounds = array<i64: 128, 128>}, {pipeline_mode = #tpu.pipeline_mode<synchronous>, transform_indices = @transform_7, window_bounds = array<i64: 1, 128>}, {pipeline_mode = #tpu.pipeline_mode<synchronous>, transform_indices = @transform_8, window_bounds = array<i64: 128, 128>}, {pipeline_mode = #tpu.pipeline_mode<synchronous>, transform_indices = @transform_9, window_bounds = array<i64: 1, 128>}, {transform_indices = @transform_10, window_bounds = array<i64: 8, 128>}, {transform_indices = @transform_11, window_bounds = array<i64: 8, 128>}]} {
    %c0 = arith.constant 0 : index
    %c0_0 = arith.constant 0 : index
    %0 = vector.load %arg2[%c0, %c0_0] : memref<8x128xf32, #tpu.memory_space<vmem>>, vector<8x128xf32>
    %c0_1 = arith.constant 0 : index
    %c0_2 = arith.constant 0 : index
    %1 = vector.load %arg1[%c0_1, %c0_2] : memref<8x16xf32, #tpu.memory_space<vmem>>, vector<8x16xf32>
    %2 = arith.truncf %1 : vector<8x16xf32> to vector<8x16xbf16>
    %3 = arith.truncf %0 : vector<8x128xf32> to vector<8x128xbf16>
    %c0_3 = arith.constant 0 : index
    %c0_4 = arith.constant 0 : index
    %4 = vector.load %arg3[%c0_3, %c0_4] : memref<16x384xbf16, #tpu.memory_space<vmem>>, vector<16x384xbf16>
    %cst = arith.constant dense<0.000000e+00> : vector<8x384xf32>
    %5 = tpu.matmul %2, %4, %cst {dimension_numbers = #tpu.dot_dimension_numbers<[1], [0], [0], [1], [0, 0, 1, 1], [], []>} : vector<8x16xbf16>, vector<16x384xbf16>, vector<8x384xf32> -> vector<8x384xf32>
    %c0_5 = arith.constant 0 : index
    %c0_6 = arith.constant 0 : index
    %6 = vector.load %arg5[%c0_5, %c0_6] : memref<1x384xf32, #tpu.memory_space<vmem>>, vector<1x384xf32>
    %7 = vector.broadcast %6 : vector<1x384xf32> to vector<8x384xf32>
    %8 = arith.addf %5, %7 : vector<8x384xf32>
    %c0_7 = arith.constant 0 : index
    %c0_8 = arith.constant 0 : index
    %9 = vector.load %arg4[%c0_7, %c0_8] : memref<128x384xbf16, #tpu.memory_space<vmem>>, vector<128x384xbf16>
    %cst_9 = arith.constant dense<0.000000e+00> : vector<8x384xf32>
    %10 = tpu.matmul %3, %9, %cst_9 {dimension_numbers = #tpu.dot_dimension_numbers<[1], [0], [0], [1], [0, 0, 1, 1], [], []>} : vector<8x128xbf16>, vector<128x384xbf16>, vector<8x384xf32> -> vector<8x384xf32>
    %11 = vector.extract_strided_slice %8 {offsets = [0, 0], sizes = [8, 128], strides = [1, 1]} : vector<8x384xf32> to vector<8x128xf32>
    %12 = vector.extract_strided_slice %8 {offsets = [0, 128], sizes = [8, 128], strides = [1, 1]} : vector<8x384xf32> to vector<8x128xf32>
    %13 = vector.extract_strided_slice %8 {offsets = [0, 256], sizes = [8, 128], strides = [1, 1]} : vector<8x384xf32> to vector<8x128xf32>
    %14 = vector.extract_strided_slice %10 {offsets = [0, 0], sizes = [8, 128], strides = [1, 1]} : vector<8x384xf32> to vector<8x128xf32>
    %15 = vector.extract_strided_slice %10 {offsets = [0, 128], sizes = [8, 128], strides = [1, 1]} : vector<8x384xf32> to vector<8x128xf32>
    %16 = vector.extract_strided_slice %10 {offsets = [0, 256], sizes = [8, 128], strides = [1, 1]} : vector<8x384xf32> to vector<8x128xf32>
    %17 = arith.addf %11, %14 : vector<8x128xf32>
    %18 = arith.negf %17 : vector<8x128xf32>
    %19 = math.exp %18 : vector<8x128xf32>
    %cst_10 = arith.constant 1.000000e+00 : f32
    %20 = vector.broadcast %cst_10 : f32 to vector<8x128xf32>
    %21 = arith.addf %20, %19 : vector<8x128xf32>
    %22 = arith.divf %20, %21 : vector<8x128xf32>
    %23 = arith.addf %12, %15 : vector<8x128xf32>
    %24 = arith.negf %23 : vector<8x128xf32>
    %25 = math.exp %24 : vector<8x128xf32>
    %cst_11 = arith.constant 1.000000e+00 : f32
    %26 = vector.broadcast %cst_11 : f32 to vector<8x128xf32>
    %27 = arith.addf %26, %25 : vector<8x128xf32>
    %28 = arith.divf %26, %27 : vector<8x128xf32>
    %c0_12 = arith.constant 0 : index
    %c0_13 = arith.constant 0 : index
    %29 = vector.load %arg6[%c0_12, %c0_13] : memref<1x128xf32, #tpu.memory_space<vmem>>, vector<1x128xf32>
    %30 = vector.broadcast %29 : vector<1x128xf32> to vector<8x128xf32>
    %31 = arith.addf %16, %30 : vector<8x128xf32>
    %32 = arith.mulf %22, %31 : vector<8x128xf32>
    %33 = arith.addf %13, %32 : vector<8x128xf32>
    %34 = math.tanh %33 : vector<8x128xf32>
    %cst_14 = arith.constant 1.000000e+00 : f32
    %35 = vector.broadcast %cst_14 : f32 to vector<8x128xf32>
    %36 = arith.subf %35, %28 : vector<8x128xf32>
    %37 = arith.mulf %36, %34 : vector<8x128xf32>
    %38 = arith.mulf %28, %0 : vector<8x128xf32>
    %39 = arith.addf %37, %38 : vector<8x128xf32>
    %c0_15 = arith.constant 0 : index
    %c0_16 = arith.constant 0 : index
    %40 = vector.load %arg12[%c0_15, %c0_16] : memref<8x128xf32, #tpu.memory_space<vmem>>, vector<8x128xf32>
    tpu.vector_store %arg12[%c0_15, %c0_16], %39 {strides = array<i32>} : memref<8x128xf32, #tpu.memory_space<vmem>>, vector<8x128xf32>,
    %41 = arith.truncf %39 : vector<8x128xf32> to vector<8x128xbf16>
    %c0_17 = arith.constant 0 : index
    %c0_18 = arith.constant 0 : index
    %42 = vector.load %arg7[%c0_17, %c0_18] : memref<128x128xbf16, #tpu.memory_space<vmem>>, vector<128x128xbf16>
    %cst_19 = arith.constant dense<0.000000e+00> : vector<8x128xf32>
    %43 = tpu.matmul %41, %42, %cst_19 {dimension_numbers = #tpu.dot_dimension_numbers<[1], [0], [0], [1], [0, 0, 1, 1], [], []>} : vector<8x128xbf16>, vector<128x128xbf16>, vector<8x128xf32> -> vector<8x128xf32>
    %c0_20 = arith.constant 0 : index
    %c0_21 = arith.constant 0 : index
    %44 = vector.load %arg8[%c0_20, %c0_21] : memref<1x128xf32, #tpu.memory_space<vmem>>, vector<1x128xf32>
    %45 = vector.broadcast %44 : vector<1x128xf32> to vector<8x128xf32>
    %46 = arith.addf %43, %45 : vector<8x128xf32>
    %cst_22 = arith.constant 0.000000e+00 : f32
    %47 = vector.broadcast %cst_22 : f32 to vector<8x128xf32>
    %48 = arith.maximumf %46, %47 : vector<8x128xf32>
    %49 = arith.truncf %48 : vector<8x128xf32> to vector<8x128xbf16>
    %c0_23 = arith.constant 0 : index
    %c0_24 = arith.constant 0 : index
    %50 = vector.load %arg9[%c0_23, %c0_24] : memref<128x128xbf16, #tpu.memory_space<vmem>>, vector<128x128xbf16>
    %cst_25 = arith.constant dense<0.000000e+00> : vector<8x128xf32>
    %51 = tpu.matmul %49, %50, %cst_25 {dimension_numbers = #tpu.dot_dimension_numbers<[1], [0], [0], [1], [0, 0, 1, 1], [], []>} : vector<8x128xbf16>, vector<128x128xbf16>, vector<8x128xf32> -> vector<8x128xf32>
    %c0_26 = arith.constant 0 : index
    %c0_27 = arith.constant 0 : index
    %52 = vector.load %arg10[%c0_26, %c0_27] : memref<1x128xf32, #tpu.memory_space<vmem>>, vector<1x128xf32>
    %53 = vector.broadcast %52 : vector<1x128xf32> to vector<8x128xf32>
    %54 = arith.addf %51, %53 : vector<8x128xf32>
    %c0_28 = arith.constant 0 : index
    %c0_29 = arith.constant 0 : index
    %55 = vector.load %arg11[%c0_28, %c0_29] : memref<8x128xf32, #tpu.memory_space<vmem>>, vector<8x128xf32>
    tpu.vector_store %arg11[%c0_28, %c0_29], %54 {strides = array<i32>} : memref<8x128xf32, #tpu.memory_space<vmem>>, vector<8x128xf32>,
    return
  }
  func.func @transform_0(%arg0: i32) -> (i32, i32) {
    %c0_i32 = arith.constant 0 : i32
    %c0_i32_0 = arith.constant 0 : i32
    return %arg0, %c0_i32 : i32, i32
  }
  func.func @transform_1(%arg0: i32) -> (i32, i32) {
    %c0_i32 = arith.constant 0 : i32
    %c0_i32_0 = arith.constant 0 : i32
    return %arg0, %c0_i32 : i32, i32
  }
  func.func @transform_2(%arg0: i32) -> (i32, i32) {
    %c0_i32 = arith.constant 0 : i32
    %c0_i32_0 = arith.constant 0 : i32
    %c0_i32_1 = arith.constant 0 : i32
    return %c0_i32, %c0_i32_0 : i32, i32
  }
  func.func @transform_3(%arg0: i32) -> (i32, i32) {
    %c0_i32 = arith.constant 0 : i32
    %c0_i32_0 = arith.constant 0 : i32
    %c0_i32_1 = arith.constant 0 : i32
    return %c0_i32, %c0_i32_0 : i32, i32
  }
  func.func @transform_4(%arg0: i32) -> (i32, i32) {
    %c0_i32 = arith.constant 0 : i32
    %c0_i32_0 = arith.constant 0 : i32
    %c0_i32_1 = arith.constant 0 : i32
    return %c0_i32, %c0_i32_0 : i32, i32
  }
  func.func @transform_5(%arg0: i32) -> (i32, i32) {
    %c0_i32 = arith.constant 0 : i32
    %c0_i32_0 = arith.constant 0 : i32
    %c0_i32_1 = arith.constant 0 : i32
    return %c0_i32, %c0_i32_0 : i32, i32
  }
  func.func @transform_6(%arg0: i32) -> (i32, i32) {
    %c0_i32 = arith.constant 0 : i32
    %c0_i32_0 = arith.constant 0 : i32
    %c0_i32_1 = arith.constant 0 : i32
    return %c0_i32, %c0_i32_0 : i32, i32
  }
  func.func @transform_7(%arg0: i32) -> (i32, i32) {
    %c0_i32 = arith.constant 0 : i32
    %c0_i32_0 = arith.constant 0 : i32
    %c0_i32_1 = arith.constant 0 : i32
    return %c0_i32, %c0_i32_0 : i32, i32
  }
  func.func @transform_8(%arg0: i32) -> (i32, i32) {
    %c0_i32 = arith.constant 0 : i32
    %c0_i32_0 = arith.constant 0 : i32
    %c0_i32_1 = arith.constant 0 : i32
    return %c0_i32, %c0_i32_0 : i32, i32
  }
  func.func @transform_9(%arg0: i32) -> (i32, i32) {
    %c0_i32 = arith.constant 0 : i32
    %c0_i32_0 = arith.constant 0 : i32
    %c0_i32_1 = arith.constant 0 : i32
    return %c0_i32, %c0_i32_0 : i32, i32
  }
  func.func @transform_10(%arg0: i32) -> (i32, i32) {
    %c0_i32 = arith.constant 0 : i32
    %c0_i32_0 = arith.constant 0 : i32
    return %arg0, %c0_i32 : i32, i32
  }
  func.func @transform_11(%arg0: i32) -> (i32, i32) {
    %c0_i32 = arith.constant 0 : i32
    %c0_i32_0 = arith.constant 0 : i32
    return %arg0, %c0_i32 : i32, i32
  }
}

</mosaic_0001>

<llo_original>
// kernel: tpu_custom_call.1
$region0: #{tpu_custom_call.1}
  #allocation0 [shape = 'u32[]', space=smem, size = 0x4, offset = 0x4, fixed_abs, tag = 'smem constant byte address 0x4 - core index']
  #allocation1 [shape = 'u32[144,128]{1,0:T(1,128)}', space=vmem, size = 0x12000, scoped, tag = 'internal scratch']
  %s0 = inlined_call_operand.vmem [shape: f32[8,16], index: 0, kind: input, shape index: {}]
  %s1 = inlined_call_operand.hbm [shape: f32[8,128], index: 1, kind: input, shape index: {}, may-alias: {1,11}]
  %s2 = inlined_call_operand.vmem [shape: bf16[16,384], index: 2, kind: input, shape index: {}]
  %s3 = inlined_call_operand.hbm [shape: bf16[128,384], index: 3, kind: input, shape index: {}]
  %s4 = inlined_call_operand.hbm [shape: f32[1,384], index: 4, kind: input, shape index: {}]
  %s5 = inlined_call_operand.hbm [shape: f32[1,128], index: 5, kind: input, shape index: {}]
  %s6 = inlined_call_operand.hbm [shape: bf16[128,128], index: 6, kind: input, shape index: {}]
  %s7 = inlined_call_operand.hbm [shape: f32[1,128], index: 7, kind: input, shape index: {}]
  %s8 = inlined_call_operand.hbm [shape: bf16[128,128], index: 8, kind: input, shape index: {}]
  %s9 = inlined_call_operand.hbm [shape: f32[1,128], index: 9, kind: input, shape index: {}]
  %s10 = inlined_call_operand.hbm [shape: f32[8,128], index: 10, kind: output, shape index: {0}]
  %s11 = inlined_call_operand.hbm [shape: f32[8,128], index: 11, kind: output, shape index: {1}, may-alias: {1,11}]
  %12 = xla_tuple %s10, %s11
  %s13 = sld [smem:[#allocation0]]
  $region90: #{tpu_custom_call.1} parent=0
    _
  %s15 = ssub.s32 1, %s13
  %s16 = scalar_select 0, %s15, %s13
  $region1: #{tpu_custom_call.1} parent=0
    #allocation2 [shape = 'u8[4096]{0}', space=vmem, size = 0x1000, scoped, tag = 'input window, operand 1, single buffered']
    #allocation3 [shape = 's32[1]{0}', space=sflag, size = 0x4, scoped, tag = 'scoped memory for tpu_custom_call.1']
    #allocation4 [shape = 's32[1]{0}', space=sflag, size = 0x4, scoped, tag = 'scoped memory for tpu_custom_call.1']
    #allocation5 [shape = 'u8[98304]{0}', space=vmem, size = 0x18000, scoped, tag = 'input window, operand 3, single buffered']
    #allocation6 [shape = 's32[1]{0}', space=sflag, size = 0x4, scoped, tag = 'scoped memory for tpu_custom_call.1']
    #allocation7 [shape = 'u8[1536]{0}', space=vmem, size = 0x800, scoped, tag = 'input window, operand 4, single buffered']
    #allocation8 [shape = 'u8[512]{0}', space=vmem, size = 0x400, scoped, tag = 'input window, operand 5, single buffered']
    #allocation9 [shape = 's32[1]{0}', space=sflag, size = 0x4, scoped, tag = 'scoped memory for tpu_custom_call.1']
    #allocation10 [shape = 'u8[32768]{0}', space=vmem, size = 0x8000, scoped, tag = 'input window, operand 6, single buffered']
    #allocation11 [shape = 'u8[512]{0}', space=vmem, size = 0x400, scoped, tag = 'input window, operand 7, single buffered']
    #allocation12 [shape = 's32[1]{0}', space=sflag, size = 0x4, scoped, tag = 'scoped memory for tpu_custom_call.1']
    #allocation13 [shape = 'u8[32768]{0}', space=vmem, size = 0x8000, scoped, tag = 'input window, operand 8, single buffered']
    #allocation14 [shape = 'u8[512]{0}', space=vmem, size = 0x400, scoped, tag = 'input window, operand 9, single buffered']
    #allocation15 [shape = 's32[1]{0}', space=sflag, size = 0x4, scoped, tag = 'scoped memory for tpu_custom_call.1']
    #allocation16 [shape = 'u8[4096]{0}', space=vmem, size = 0x1000, scoped, tag = 'output window, operand 0, single buffered']
    #allocation17 [shape = 'u8[4096]{0}', space=vmem, size = 0x1000, scoped, tag = 'output window, operand 1, single buffered']
    #allocation18 [shape = 's32[1]{0}', space=sflag, size = 0x4, scoped, tag = 'scoped memory for tpu_custom_call.1']
    %17 = vsyncpa [#allocation3], 0
    %18 = vsyncpa [#allocation6], 0
    %19 = vsyncpa [#allocation9], 0
    %20 = vsyncpa [#allocation12], 0
    %21 = vsyncpa [#allocation15], 0
    %22 = vsyncpa [#allocation4], 0
    %23 = vsyncpa [#allocation18], 0
    // Predicated region
    $region2: #{tpu_custom_call.1} parent=1 // pred_check
      _
    $region3: #{tpu_custom_call.1} parent=1 // pred_check_branch
      %25 = sbr.rel (0) target = $region5
    $region4: #{tpu_custom_call.1} parent=1 // pred_region
      _
    $region5: #{tpu_custom_call.1} parent=1 // pred_fallthru
      _
    // Predicated region
    $region6: #{tpu_custom_call.1} parent=1 // pred_check
      _
    $region7: #{tpu_custom_call.1} parent=1 // pred_check_branch
      %27 = sbr.rel (0) target = $region9
    $region8: #{tpu_custom_call.1} parent=1 // pred_region
      %s29 = ssub.s32 128, 128
      %30 = vsyncadd [#allocation3], %s29
      %s32 = sshll.u32 [#allocation2], 4
      %s33 = int_to_ptr.vmem [resolvable:$true] %s32
      %35 = dma.hbm_to_vmem [thread:$0]  %s1, 128, %s33, [#allocation3]
    $region9: #{tpu_custom_call.1} parent=1 // pred_fallthru
      _
    // Predicated region
    $region10: #{tpu_custom_call.1} parent=1 // pred_check
      _
    $region11: #{tpu_custom_call.1} parent=1 // pred_check_branch
      %37 = sbr.rel (0) target = $region13
    $region12: #{tpu_custom_call.1} parent=1 // pred_region
      _
    $region13: #{tpu_custom_call.1} parent=1 // pred_fallthru
      _
    // Predicated region
    $region14: #{tpu_custom_call.1} parent=1 // pred_check
      _
    $region15: #{tpu_custom_call.1} parent=1 // pred_check_branch
      %39 = sbr.rel (0) target = $region17
    $region16: #{tpu_custom_call.1} parent=1 // pred_region
      %s41 = ssub.s32 3072, 3072
      %42 = vsyncadd [#allocation6], %s41
      %s43 = sshll.u32 [#allocation5], 4
      %s44 = int_to_ptr.vmem [resolvable:$true] %s43
      %49 = dma.hbm_to_vmem [thread:$0]  %s3, 3072, %s44, [#allocation6], 192, 192, 12
    $region17: #{tpu_custom_call.1} parent=1 // pred_fallthru
      _
    // Predicated region
    $region18: #{tpu_custom_call.1} parent=1 // pred_check
      _
    $region19: #{tpu_custom_call.1} parent=1 // pred_check_branch
      %51 = sbr.rel (0) target = $region21
    $region20: #{tpu_custom_call.1} parent=1 // pred_region
      %s53 = ssub.s32 48, 48
      %54 = vsyncadd [#allocation6], %s53
      %s56 = sshll.u32 [#allocation7], 4
      %s57 = int_to_ptr.vmem [resolvable:$true] %s56
      %59 = dma.hbm_to_vmem [thread:$0]  %s4, 48, %s57, [#allocation6]
    $region21: #{tpu_custom_call.1} parent=1 // pred_fallthru
      _
    // Predicated region
    $region22: #{tpu_custom_call.1} parent=1 // pred_check
      _
    $region23: #{tpu_custom_call.1} parent=1 // pred_check_branch
      %61 = sbr.rel (0) target = $region25
    $region24: #{tpu_custom_call.1} parent=1 // pred_region
      %s63 = ssub.s32 16, 16
      %64 = vsyncadd [#allocation9], %s63
      %s66 = sshll.u32 [#allocation8], 4
      %s67 = int_to_ptr.vmem [resolvable:$true] %s66
      %69 = dma.hbm_to_vmem [thread:$0]  %s5, 16, %s67, [#allocation9]
    $region25: #{tpu_custom_call.1} parent=1 // pred_fallthru
      _
    // Predicated region
    $region26: #{tpu_custom_call.1} parent=1 // pred_check
      _
    $region27: #{tpu_custom_call.1} parent=1 // pred_check_branch
      %71 = sbr.rel (0) target = $region29
    $region28: #{tpu_custom_call.1} parent=1 // pred_region
      %s73 = ssub.s32 1024, 1024
      %74 = vsyncadd [#allocation9], %s73
      %s75 = sshll.u32 [#allocation10], 4
      %s76 = int_to_ptr.vmem [resolvable:$true] %s75
      %81 = dma.hbm_to_vmem [thread:$0]  %s6, 1024, %s76, [#allocation9], 64, 64, 4
    $region29: #{tpu_custom_call.1} parent=1 // pred_fallthru
      _
    // Predicated region
    $region30: #{tpu_custom_call.1} parent=1 // pred_check
      _
    $region31: #{tpu_custom_call.1} parent=1 // pred_check_branch
      %83 = sbr.rel (0) target = $region33
    $region32: #{tpu_custom_call.1} parent=1 // pred_region
      %s85 = ssub.s32 16, 16
      %86 = vsyncadd [#allocation12], %s85
      %s88 = sshll.u32 [#allocation11], 4
      %s89 = int_to_ptr.vmem [resolvable:$true] %s88
      %91 = dma.hbm_to_vmem [thread:$0]  %s7, 16, %s89, [#allocation12]
    $region33: #{tpu_custom_call.1} parent=1 // pred_fallthru
      _
    // Predicated region
    $region34: #{tpu_custom_call.1} parent=1 // pred_check
      _
    $region35: #{tpu_custom_call.1} parent=1 // pred_check_branch
      %93 = sbr.rel (0) target = $region37
    $region36: #{tpu_custom_call.1} parent=1 // pred_region
      %s95 = ssub.s32 1024, 1024
      %96 = vsyncadd [#allocation12], %s95
      %s97 = sshll.u32 [#allocation13], 4
      %s98 = int_to_ptr.vmem [resolvable:$true] %s97
      %103 = dma.hbm_to_vmem [thread:$0]  %s8, 1024, %s98, [#allocation12], 64, 64, 4
    $region37: #{tpu_custom_call.1} parent=1 // pred_fallthru
      _
    // Predicated region
    $region38: #{tpu_custom_call.1} parent=1 // pred_check
      _
    $region39: #{tpu_custom_call.1} parent=1 // pred_check_branch
      %105 = sbr.rel (0) target = $region41
    $region40: #{tpu_custom_call.1} parent=1 // pred_region
      %s107 = ssub.s32 16, 16
      %108 = vsyncadd [#allocation15], %s107
      %s110 = sshll.u32 [#allocation14], 4
      %s111 = int_to_ptr.vmem [resolvable:$true] %s110
      %113 = dma.hbm_to_vmem [thread:$0]  %s9, 16, %s111, [#allocation15]
    $region41: #{tpu_custom_call.1} parent=1 // pred_fallthru
      _
    // Predicated region
    $region42: #{tpu_custom_call.1} parent=1 // pred_check
      _
    $region43: #{tpu_custom_call.1} parent=1 // pred_check_branch
      %115 = sbr.rel (0) target = $region45
    $region44: #{tpu_custom_call.1} parent=1 // pred_region
      %116 = dma.done [#allocation3], 128
    $region45: #{tpu_custom_call.1} parent=1 // pred_fallthru
      _
    // Predicated region
    $region46: #{tpu_custom_call.1} parent=1 // pred_check
      _
    $region47: #{tpu_custom_call.1} parent=1 // pred_check_branch
      %118 = sbr.rel (0) target = $region49
    $region48: #{tpu_custom_call.1} parent=1 // pred_region
      %119 = dma.done [#allocation6], 3072
    $region49: #{tpu_custom_call.1} parent=1 // pred_fallthru
      _
    // Predicated region
    $region50: #{tpu_custom_call.1} parent=1 // pred_check
      _
    $region51: #{tpu_custom_call.1} parent=1 // pred_check_branch
      %121 = sbr.rel (0) target = $region53
    $region52: #{tpu_custom_call.1} parent=1 // pred_region
      %122 = dma.done [#allocation6], 48
    $region53: #{tpu_custom_call.1} parent=1 // pred_fallthru
      _
    // Predicated region
    $region54: #{tpu_custom_call.1} parent=1 // pred_check
      _
    $region55: #{tpu_custom_call.1} parent=1 // pred_check_branch
      %124 = sbr.rel (0) target = $region57
    $region56: #{tpu_custom_call.1} parent=1 // pred_region
      %125 = dma.done [#allocation9], 16
    $region57: #{tpu_custom_call.1} parent=1 // pred_fallthru
      _
    // Predicated region
    $region58: #{tpu_custom_call.1} parent=1 // pred_check
      _
    $region59: #{tpu_custom_call.1} parent=1 // pred_check_branch
      %127 = sbr.rel (0) target = $region61
    $region60: #{tpu_custom_call.1} parent=1 // pred_region
      %128 = dma.done [#allocation9], 1024
    $region61: #{tpu_custom_call.1} parent=1 // pred_fallthru
      _
    // Predicated region
    $region62: #{tpu_custom_call.1} parent=1 // pred_check
      _
    $region63: #{tpu_custom_call.1} parent=1 // pred_check_branch
      %130 = sbr.rel (0) target = $region65
    $region64: #{tpu_custom_call.1} parent=1 // pred_region
      %131 = dma.done [#allocation12], 16
    $region65: #{tpu_custom_call.1} parent=1 // pred_fallthru
      _
    // Predicated region
    $region66: #{tpu_custom_call.1} parent=1 // pred_check
      _
    $region67: #{tpu_custom_call.1} parent=1 // pred_check_branch
      %133 = sbr.rel (0) target = $region69
    $region68: #{tpu_custom_call.1} parent=1 // pred_region
      %134 = dma.done [#allocation12], 1024
    $region69: #{tpu_custom_call.1} parent=1 // pred_fallthru
      _
    // Predicated region
    $region70: #{tpu_custom_call.1} parent=1 // pred_check
      _
    $region71: #{tpu_custom_call.1} parent=1 // pred_check_branch
      %136 = sbr.rel (0) target = $region73
    $region72: #{tpu_custom_call.1} parent=1 // pred_region
      %137 = dma.done [#allocation15], 16
    $region73: #{tpu_custom_call.1} parent=1 // pred_fallthru
      _
    %v139 = vld [vmem:[#allocation2] sm:$0xff]
    %v140 = vld [vmem:[%s0] sm:$0xff]
    %v141 = vpack.c.bf16 %v140, %v140
    %v142 = vpack.c.bf16 %v139, %v139
    %v143 = vld [vmem:[%s2] sm:$0xff]
    %v144 = vld [vmem:[%s2 + $0x8] sm:$0xf]
    %v145 = vld [vmem:[%s2 + $0xc] sm:$0xff]
    %v146 = vld [vmem:[%s2 + $0x14] sm:$0xf]
    %v147 = vld [vmem:[#allocation7] sm:$0x7]
    %v149 = vlaneseq
    %v150 = vshrl.u32 %v149, 7
    %v151 = vsub.s32 0, %v150
    %v152 = vrot.slane %v147, %v151
    %v153 = vlaneseq
    %v154 = vshrl.u32 %v153, 7
    %v155 = vsub.s32 1, %v154
    %v156 = vrot.slane %v147, %v155
    %v157 = vlaneseq
    %v158 = vshrl.u32 %v157, 7
    %v159 = vsub.s32 2, %v158
    %v160 = vrot.slane %v147, %v159
    %v168 = vunpack.c.l.b16 %v143
    %v169 = vunpack.c.h.b16 %v143
    %v170 = vunpack.c.l.b16 %v144
    %v171 = vunpack.c.l.b16 %v145
    %v172 = vunpack.c.h.b16 %v145
    %v173 = vunpack.c.l.b16 %v146
    %v174 = vpack.c.b16 %v171, %v168
    %v175 = vpack.c.b16 %v172, %v169
    %v176 = vpack.c.b16 %v173, %v170
    %vm180 = vcmask 130048
    %v182 = vsel %vm180, %v141, 0
    %184 = vmatprep.subr.bf16.mxu0 0
    %185 = vmatpush1.bf16.msra.mxu0 0
    %186 = vmatprep.subr.bf16.mxu0 0
    %187 = vmatpush1.bf16.msra.mxu0 0
    %188 = vmatprep.subr.bf16.mxu0 0
    %189 = vmatpush1.bf16.msra.mxu0 0
    %190 = vmatprep.subr.bf16.mxu0 0
    %191 = vmatpush1.bf16.msra.mxu0 0
    %192 = vmatprep.subr.bf16.mxu0 0
    %193 = vmatpush1.bf16.msra.mxu0 0
    %194 = vmatprep.subr.bf16.mxu0 0
    %195 = vmatpush1.bf16.msra.mxu0 0
    %196 = vmatprep.subr.bf16.mxu0 0
    %197 = vmatpush1.bf16.msra.mxu0 0
    %198 = vmatprep.subr.bf16.mxu0 %v175
    %199 = vmatpush1.bf16.msra.mxu0 %v174
    %200 = vmatprep.subr.bf16.mxu0 0
    %201 = vmatpush2.bf16.msra.mxu0 0
    %202 = vmatprep.subr.bf16.mxu0 0
    %203 = vmatpush2.bf16.msra.mxu0 0
    %204 = vmatprep.subr.bf16.mxu0 0
    %205 = vmatpush2.bf16.msra.mxu0 0
    %206 = vmatprep.subr.bf16.mxu0 0
    %207 = vmatpush2.bf16.msra.mxu0 0
    %208 = vmatprep.subr.bf16.mxu0 0
    %209 = vmatpush2.bf16.msra.mxu0 0
    %210 = vmatprep.subr.bf16.mxu0 0
    %211 = vmatpush2.bf16.msra.mxu0 0
    %212 = vmatprep.subr.bf16.mxu0 0
    %213 = vmatpush2.bf16.msra.mxu0 0
    %214 = vmatprep.subr.bf16.mxu0 0
    %215 = vmatpush2.bf16.msra.mxu0 0
    %216 = vmatprep.mubr.bf16.mxu0 0
    %217 = vmatmul.mubr.bf16.gmra.mxu0 %v182
    %v218 = vpop.f32.mrf.mxu0
    %v219 = vadd.f32 %v152, %v218
    %v220 = vpop.f32.mrf.mxu0
    %v221 = vadd.f32 %v156, %v220
    %v222 = vpop.f32.mrf.mxu0
    %v223 = vpop.f32.mrf.mxu0
    %224 = vdwg.mxu0
    %225 = vmatprep.subr.bf16.mxu0 0
    %226 = vmatpush1.bf16.msra.mxu0 0
    %227 = vmatprep.subr.bf16.mxu0 0
    %228 = vmatpush1.bf16.msra.mxu0 0
    %229 = vmatprep.subr.bf16.mxu0 0
    %230 = vmatpush1.bf16.msra.mxu0 0
    %231 = vmatprep.subr.bf16.mxu0 0
    %232 = vmatpush1.bf16.msra.mxu0 0
    %233 = vmatprep.subr.bf16.mxu0 0
    %234 = vmatpush1.bf16.msra.mxu0 0
    %235 = vmatprep.subr.bf16.mxu0 0
    %236 = vmatpush1.bf16.msra.mxu0 0
    %237 = vmatprep.subr.bf16.mxu0 0
    %238 = vmatpush1.bf16.msra.mxu0 0
    %239 = vmatprep.subr.bf16.mxu0 0
    %240 = vmatpush1.bf16.msra.mxu0 %v176
    %241 = vmatprep.subr.bf16.mxu0 0
    %242 = vmatpush2.bf16.msra.mxu0 0
    %243 = vmatprep.subr.bf16.mxu0 0
    %244 = vmatpush2.bf16.msra.mxu0 0
    %245 = vmatprep.subr.bf16.mxu0 0
    %246 = vmatpush2.bf16.msra.mxu0 0
    %247 = vmatprep.subr.bf16.mxu0 0
    %248 = vmatpush2.bf16.msra.mxu0 0
    %249 = vmatprep.subr.bf16.mxu0 0
    %250 = vmatpush2.bf16.msra.mxu0 0
    %251 = vmatprep.subr.bf16.mxu0 0
    %252 = vmatpush2.bf16.msra.mxu0 0
    %253 = vmatprep.subr.bf16.mxu0 0
    %254 = vmatpush2.bf16.msra.mxu0 0
    %255 = vmatprep.subr.bf16.mxu0 0
    %256 = vmatpush2.bf16.msra.mxu0 0
    %257 = vmatprep.mubr.bf16.mxu0 0
    %258 = vmatmul.mubr.bf16.gmra.mxu0 %v182
    %v259 = vpop.f32.mrf.mxu0
    %v260 = vadd.f32 %v160, %v259
    %v261 = vpop.f32.mrf.mxu0
    %v262 = vpop.f32.mrf.mxu0
    %v263 = vpop.f32.mrf.mxu0
    %264 = vdwg.mxu0
    %v265 = vld [vmem:[#allocation5] sm:$0xff]
    %v266 = vld [vmem:[#allocation5 + $0x8] sm:$0xf]
    %v267 = vld [vmem:[#allocation5 + $0xc] sm:$0xff]
    %v268 = vld [vmem:[#allocation5 + $0x14] sm:$0xf]
    %v269 = vld [vmem:[#allocation5 + $0x18] sm:$0xff]
    %v270 = vld [vmem:[#allocation5 + $0x20] sm:$0xf]
    %v271 = vld [vmem:[#allocation5 + $0x24] sm:$0xff]
    %v272 = vld [vmem:[#allocation5 + $0x2c] sm:$0xf]
    %v273 = vld [vmem:[#allocation5 + $0x30] sm:$0xff]
    %v274 = vld [vmem:[#allocation5 + $0x38] sm:$0xf]
    %v275 = vld [vmem:[#allocation5 + $0x3c] sm:$0xff]
    %v276 = vld [vmem:[#allocation5 + $0x44] sm:$0xf]
    %v277 = vld [vmem:[#allocation5 + $0x48] sm:$0xff]
    %v278 = vld [vmem:[#allocation5 + $0x50] sm:$0xf]
    %v279 = vld [vmem:[#allocation5 + $0x54] sm:$0xff]
    %v280 = vld [vmem:[#allocation5 + $0x5c] sm:$0xf]
    %v281 = vld [vmem:[#allocation5 + $0x60] sm:$0xff]
    %v282 = vld [vmem:[#allocation5 + $0x68] sm:$0xf]
    %v283 = vld [vmem:[#allocation5 + $0x6c] sm:$0xff]
    %v284 = vld [vmem:[#allocation5 + $0x74] sm:$0xf]
    %v285 = vld [vmem:[#allocation5 + $0x78] sm:$0xff]
    %v286 = vld [vmem:[#allocation5 + $0x80] sm:$0xf]
    %v287 = vld [vmem:[#allocation5 + $0x84] sm:$0xff]
    %v288 = vld [vmem:[#allocation5 + $0x8c] sm:$0xf]
    %v289 = vld [vmem:[#allocation5 + $0x90] sm:$0xff]
    %v290 = vld [vmem:[#allocation5 + $0x98] sm:$0xf]
    %v291 = vld [vmem:[#allocation5 + $0x9c] sm:$0xff]
    %v292 = vld [vmem:[#allocation5 + $0xa4] sm:$0xf]
    %v293 = vld [vmem:[#allocation5 + $0xa8] sm:$0xff]
    %v294 = vld [vmem:[#allocation5 + $0xb0] sm:$0xf]
    %v295 = vld [vmem:[#allocation5 + $0xb4] sm:$0xff]
    %v296 = vld [vmem:[#allocation5 + $0xbc] sm:$0xf]
    %v329 = vunpack.c.l.b16 %v265
    %v330 = vunpack.c.h.b16 %v265
    %v331 = vunpack.c.l.b16 %v266
    %v332 = vunpack.c.l.b16 %v267
    %v333 = vunpack.c.h.b16 %v267
    %v334 = vunpack.c.l.b16 %v268
    %v335 = vunpack.c.l.b16 %v269
    %v336 = vunpack.c.h.b16 %v269
    %v337 = vunpack.c.l.b16 %v270
    %v338 = vunpack.c.l.b16 %v271
    %v339 = vunpack.c.h.b16 %v271
    %v340 = vunpack.c.l.b16 %v272
    %v341 = vunpack.c.l.b16 %v273
    %v342 = vunpack.c.h.b16 %v273
    %v343 = vunpack.c.l.b16 %v274
    %v344 = vunpack.c.l.b16 %v275
    %v345 = vunpack.c.h.b16 %v275
    %v346 = vunpack.c.l.b16 %v276
    %v347 = vunpack.c.l.b16 %v277
    %v348 = vunpack.c.h.b16 %v277
    %v349 = vunpack.c.l.b16 %v278
    %v350 = vunpack.c.l.b16 %v279
    %v351 = vunpack.c.h.b16 %v279
    %v352 = vunpack.c.l.b16 %v280
    %v353 = vunpack.c.l.b16 %v281
    %v354 = vunpack.c.h.b16 %v281
    %v355 = vunpack.c.l.b16 %v282
    %v356 = vunpack.c.l.b16 %v283
    %v357 = vunpack.c.h.b16 %v283
    %v358 = vunpack.c.l.b16 %v284
    %v359 = vunpack.c.l.b16 %v285
    %v360 = vunpack.c.h.b16 %v285
    %v361 = vunpack.c.l.b16 %v286
    %v362 = vunpack.c.l.b16 %v287
    %v363 = vunpack.c.h.b16 %v287
    %v364 = vunpack.c.l.b16 %v288
    %v365 = vunpack.c.l.b16 %v289
    %v366 = vunpack.c.h.b16 %v289
    %v367 = vunpack.c.l.b16 %v290
    %v368 = vunpack.c.l.b16 %v291
    %v369 = vunpack.c.h.b16 %v291
    %v370 = vunpack.c.l.b16 %v292
    %v371 = vunpack.c.l.b16 %v293
    %v372 = vunpack.c.h.b16 %v293
    %v373 = vunpack.c.l.b16 %v294
    %v374 = vunpack.c.l.b16 %v295
    %v375 = vunpack.c.h.b16 %v295
    %v376 = vunpack.c.l.b16 %v296
    %v377 = vpack.c.b16 %v332, %v329
    %v378 = vpack.c.b16 %v333, %v330
    %v379 = vpack.c.b16 %v334, %v331
    %v380 = vpack.c.b16 %v338, %v335
    %v381 = vpack.c.b16 %v339, %v336
    %v382 = vpack.c.b16 %v340, %v337
    %v383 = vpack.c.b16 %v344, %v341
    %v384 = vpack.c.b16 %v345, %v342
    %v385 = vpack.c.b16 %v346, %v343
    %v386 = vpack.c.b16 %v350, %v347
    %v387 = vpack.c.b16 %v351, %v348
    %v388 = vpack.c.b16 %v352, %v349
    %v389 = vpack.c.b16 %v356, %v353
    %v390 = vpack.c.b16 %v357, %v354
    %v391 = vpack.c.b16 %v358, %v355
    %v392 = vpack.c.b16 %v362, %v359
    %v393 = vpack.c.b16 %v363, %v360
    %v394 = vpack.c.b16 %v364, %v361
    %v395 = vpack.c.b16 %v368, %v365
    %v396 = vpack.c.b16 %v369, %v366
    %v397 = vpack.c.b16 %v370, %v367
    %v398 = vpack.c.b16 %v374, %v371
    %v399 = vpack.c.b16 %v375, %v372
    %v400 = vpack.c.b16 %v376, %v373
    %425 = vmatprep.subr.bf16.mxu0 %v399
    %426 = vmatpush1.bf16.msra.mxu0 %v398
    %427 = vmatprep.subr.bf16.mxu0 %v396
    %428 = vmatpush1.bf16.msra.mxu0 %v395
    %429 = vmatprep.subr.bf16.mxu0 %v393
    %430 = vmatpush1.bf16.msra.mxu0 %v392
    %431 = vmatprep.subr.bf16.mxu0 %v390
    %432 = vmatpush1.bf16.msra.mxu0 %v389
    %433 = vmatprep.subr.bf16.mxu0 %v387
    %434 = vmatpush1.bf16.msra.mxu0 %v386
    %435 = vmatprep.subr.bf16.mxu0 %v384
    %436 = vmatpush1.bf16.msra.mxu0 %v383
    %437 = vmatprep.subr.bf16.mxu0 %v381
    %438 = vmatpush1.bf16.msra.mxu0 %v380
    %439 = vmatprep.subr.bf16.mxu0 %v378
    %440 = vmatpush1.bf16.msra.mxu0 %v377
    %441 = vmatprep.subr.bf16.mxu0 0
    %442 = vmatpush2.bf16.msra.mxu0 0
    %443 = vmatprep.subr.bf16.mxu0 0
    %444 = vmatpush2.bf16.msra.mxu0 0
    %445 = vmatprep.subr.bf16.mxu0 0
    %446 = vmatpush2.bf16.msra.mxu0 0
    %447 = vmatprep.subr.bf16.mxu0 0
    %448 = vmatpush2.bf16.msra.mxu0 0
    %449 = vmatprep.subr.bf16.mxu0 0
    %450 = vmatpush2.bf16.msra.mxu0 0
    %451 = vmatprep.subr.bf16.mxu0 0
    %452 = vmatpush2.bf16.msra.mxu0 0
    %453 = vmatprep.subr.bf16.mxu0 0
    %454 = vmatpush2.bf16.msra.mxu0 0
    %455 = vmatprep.subr.bf16.mxu0 0
    %456 = vmatpush2.bf16.msra.mxu0 0
    %457 = vmatprep.mubr.bf16.mxu0 0
    %458 = vmatmul.mubr.bf16.gmra.mxu0 %v142
    %v459 = vpop.f32.mrf.mxu0
    %v460 = vadd.f32 0.0, %v459
    %v461 = vpop.f32.mrf.mxu0
    %v462 = vadd.f32 0.0, %v461
    %v463 = vpop.f32.mrf.mxu0
    %v464 = vpop.f32.mrf.mxu0
    %465 = vdwg.mxu0
    %466 = vmatprep.subr.bf16.mxu0 0
    %467 = vmatpush1.bf16.msra.mxu0 %v400
    %468 = vmatprep.subr.bf16.mxu0 0
    %469 = vmatpush1.bf16.msra.mxu0 %v397
    %470 = vmatprep.subr.bf16.mxu0 0
    %471 = vmatpush1.bf16.msra.mxu0 %v394
    %472 = vmatprep.subr.bf16.mxu0 0
    %473 = vmatpush1.bf16.msra.mxu0 %v391
    %474 = vmatprep.subr.bf16.mxu0 0
    %475 = vmatpush1.bf16.msra.mxu0 %v388
    %476 = vmatprep.subr.bf16.mxu0 0
    %477 = vmatpush1.bf16.msra.mxu0 %v385
    %478 = vmatprep.subr.bf16.mxu0 0
    %479 = vmatpush1.bf16.msra.mxu0 %v382
    %480 = vmatprep.subr.bf16.mxu0 0
    %481 = vmatpush1.bf16.msra.mxu0 %v379
    %482 = vmatprep.subr.bf16.mxu0 0
    %483 = vmatpush2.bf16.msra.mxu0 0
    %484 = vmatprep.subr.bf16.mxu0 0
    %485 = vmatpush2.bf16.msra.mxu0 0
    %486 = vmatprep.subr.bf16.mxu0 0
    %487 = vmatpush2.bf16.msra.mxu0 0
    %488 = vmatprep.subr.bf16.mxu0 0
    %489 = vmatpush2.bf16.msra.mxu0 0
    %490 = vmatprep.subr.bf16.mxu0 0
    %491 = vmatpush2.bf16.msra.mxu0 0
    %492 = vmatprep.subr.bf16.mxu0 0
    %493 = vmatpush2.bf16.msra.mxu0 0
    %494 = vmatprep.subr.bf16.mxu0 0
    %495 = vmatpush2.bf16.msra.mxu0 0
    %496 = vmatprep.subr.bf16.mxu0 0
    %497 = vmatpush2.bf16.msra.mxu0 0
    %498 = vmatprep.mubr.bf16.mxu0 0
    %499 = vmatmul.mubr.bf16.gmra.mxu0 %v142
    %v500 = vpop.f32.mrf.mxu0
    %v501 = vadd.f32 0.0, %v500
    %v502 = vpop.f32.mrf.mxu0
    %v503 = vpop.f32.mrf.mxu0
    %v504 = vpop.f32.mrf.mxu0
    %505 = vdwg.mxu0
    %v506 = vadd.f32 %v219, %v460
    %v507 = vxor.u32 %v506, 2147483648
    %v508 = vmul.f32 %v507, 1.442695
    %v509 = vpow.pop %v508
    %v510 = vadd.f32 %v509, 1.0
    %v511 = vrcp.pop %v510
    %v512 = vmul.f32 1.0, %v511
    %v513 = vadd.f32 %v221, %v462
    %v514 = vxor.u32 %v513, 2147483648
    %v515 = vmul.f32 %v514, 1.442695
    %v516 = vpow.pop %v515
    %v517 = vadd.f32 %v516, 1.0
    %v518 = vrcp.pop %v517
    %v519 = vmul.f32 1.0, %v518
    %v520 = vld [vmem:[#allocation8] sm:$0x1]
    %v522 = vlaneseq
    %v523 = vshrl.u32 %v522, 7
    %v524 = vsub.s32 0, %v523
    %v525 = vrot.slane %v520, %v524
    %v527 = vadd.f32 %v501, %v525
    %v528 = vmul.f32 %v512, %v527
    %v529 = vadd.f32 %v260, %v528
    %v530 = vtanh.pop %v529
    %v531 = vsub.f32 1.0, %v519
    %v532 = vmul.f32 %v531, %v530
    %v533 = vmul.f32 %v519, %v139
    %v534 = vadd.f32 %v532, %v533
    %535 = vst [vmem:[#allocation17] sm:$0xff] %v534
    %v536 = vpack.c.bf16 %v534, %v534
    %v537 = vld [vmem:[#allocation10] sm:$0xf]
    %v538 = vld [vmem:[#allocation10 + $0x4] sm:$0xf]
    %v539 = vld [vmem:[#allocation10 + $0x8] sm:$0xf]
    %v540 = vld [vmem:[#allocation10 + $0xc] sm:$0xf]
    %v541 = vld [vmem:[#allocation10 + $0x10] sm:$0xf]
    %v542 = vld [vmem:[#allocation10 + $0x14] sm:$0xf]
    %v543 = vld [vmem:[#allocation10 + $0x18] sm:$0xf]
    %v544 = vld [vmem:[#allocation10 + $0x1c] sm:$0xf]
    %v545 = vld [vmem:[#allocation10 + $0x20] sm:$0xf]
    %v546 = vld [vmem:[#allocation10 + $0x24] sm:$0xf]
    %v547 = vld [vmem:[#allocation10 + $0x28] sm:$0xf]
    %v548 = vld [vmem:[#allocation10 + $0x2c] sm:$0xf]
    %v549 = vld [vmem:[#allocation10 + $0x30] sm:$0xf]
    %v550 = vld [vmem:[#allocation10 + $0x34] sm:$0xf]
    %v551 = vld [vmem:[#allocation10 + $0x38] sm:$0xf]
    %v552 = vld [vmem:[#allocation10 + $0x3c] sm:$0xf]
    %v553 = vld [vmem:[#allocation11] sm:$0x1]
    %v555 = vlaneseq
    %v556 = vshrl.u32 %v555, 7
    %v557 = vsub.s32 0, %v556
    %v558 = vrot.slane %v553, %v557
    %v576 = vunpack.c.l.b16 %v537
    %v577 = vunpack.c.l.b16 %v538
    %v578 = vunpack.c.l.b16 %v539
    %v579 = vunpack.c.l.b16 %v540
    %v580 = vunpack.c.l.b16 %v541
    %v581 = vunpack.c.l.b16 %v542
    %v582 = vunpack.c.l.b16 %v543
    %v583 = vunpack.c.l.b16 %v544
    %v584 = vunpack.c.l.b16 %v545
    %v585 = vunpack.c.l.b16 %v546
    %v586 = vunpack.c.l.b16 %v547
    %v587 = vunpack.c.l.b16 %v548
    %v588 = vunpack.c.l.b16 %v549
    %v589 = vunpack.c.l.b16 %v550
    %v590 = vunpack.c.l.b16 %v551
    %v591 = vunpack.c.l.b16 %v552
    %v592 = vpack.c.b16 %v577, %v576
    %v593 = vpack.c.b16 %v579, %v578
    %v594 = vpack.c.b16 %v581, %v580
    %v595 = vpack.c.b16 %v583, %v582
    %v596 = vpack.c.b16 %v585, %v584
    %v597 = vpack.c.b16 %v587, %v586
    %v598 = vpack.c.b16 %v589, %v588
    %v599 = vpack.c.b16 %v591, %v590
    %608 = vmatprep.subr.bf16.mxu0 0
    %609 = vmatpush1.bf16.msra.mxu0 %v599
    %610 = vmatprep.subr.bf16.mxu0 0
    %611 = vmatpush1.bf16.msra.mxu0 %v598
    %612 = vmatprep.subr.bf16.mxu0 0
    %613 = vmatpush1.bf16.msra.mxu0 %v597
    %614 = vmatprep.subr.bf16.mxu0 0
    %615 = vmatpush1.bf16.msra.mxu0 %v596
    %616 = vmatprep.subr.bf16.mxu0 0
    %617 = vmatpush1.bf16.msra.mxu0 %v595
    %618 = vmatprep.subr.bf16.mxu0 0
    %619 = vmatpush1.bf16.msra.mxu0 %v594
    %620 = vmatprep.subr.bf16.mxu0 0
    %621 = vmatpush1.bf16.msra.mxu0 %v593
    %622 = vmatprep.subr.bf16.mxu0 0
    %623 = vmatpush1.bf16.msra.mxu0 %v592
    %624 = vmatprep.subr.bf16.mxu0 0
    %625 = vmatpush2.bf16.msra.mxu0 0
    %626 = vmatprep.subr.bf16.mxu0 0
    %627 = vmatpush2.bf16.msra.mxu0 0
    %628 = vmatprep.subr.bf16.mxu0 0
    %629 = vmatpush2.bf16.msra.mxu0 0
    %630 = vmatprep.subr.bf16.mxu0 0
    %631 = vmatpush2.bf16.msra.mxu0 0
    %632 = vmatprep.subr.bf16.mxu0 0
    %633 = vmatpush2.bf16.msra.mxu0 0
    %634 = vmatprep.subr.bf16.mxu0 0
    %635 = vmatpush2.bf16.msra.mxu0 0
    %636 = vmatprep.subr.bf16.mxu0 0
    %637 = vmatpush2.bf16.msra.mxu0 0
    %638 = vmatprep.subr.bf16.mxu0 0
    %639 = vmatpush2.bf16.msra.mxu0 0
    %640 = vmatprep.mubr.bf16.mxu0 0
    %641 = vmatmul.mubr.bf16.gmra.mxu0 %v536
    %v642 = vpop.f32.mrf.mxu0
    %v643 = vadd.f32 %v558, %v642
    %v644 = vpop.f32.mrf.mxu0
    %v645 = vpop.f32.mrf.mxu0
    %v646 = vpop.f32.mrf.mxu0
    %647 = vdwg.mxu0
    %v648 = vmax.f32 %v643, 0.0
    %v649 = vpack.c.bf16 %v648, %v648
    %v650 = vld [vmem:[#allocation13] sm:$0xf]
    %v651 = vld [vmem:[#allocation13 + $0x4] sm:$0xf]
    %v652 = vld [vmem:[#allocation13 + $0x8] sm:$0xf]
    %v653 = vld [vmem:[#allocation13 + $0xc] sm:$0xf]
    %v654 = vld [vmem:[#allocation13 + $0x10] sm:$0xf]
    %v655 = vld [vmem:[#allocation13 + $0x14] sm:$0xf]
    %v656 = vld [vmem:[#allocation13 + $0x18] sm:$0xf]
    %v657 = vld [vmem:[#allocation13 + $0x1c] sm:$0xf]
    %v658 = vld [vmem:[#allocation13 + $0x20] sm:$0xf]
    %v659 = vld [vmem:[#allocation13 + $0x24] sm:$0xf]
    %v660 = vld [vmem:[#allocation13 + $0x28] sm:$0xf]
    %v661 = vld [vmem:[#allocation13 + $0x2c] sm:$0xf]
    %v662 = vld [vmem:[#allocation13 + $0x30] sm:$0xf]
    %v663 = vld [vmem:[#allocation13 + $0x34] sm:$0xf]
    %v664 = vld [vmem:[#allocation13 + $0x38] sm:$0xf]
    %v665 = vld [vmem:[#allocation13 + $0x3c] sm:$0xf]
    %v666 = vld [vmem:[#allocation14] sm:$0x1]
    %v668 = vlaneseq
    %v669 = vshrl.u32 %v668, 7
    %v670 = vsub.s32 0, %v669
    %v671 = vrot.slane %v666, %v670
    %v689 = vunpack.c.l.b16 %v650
    %v690 = vunpack.c.l.b16 %v651
    %v691 = vunpack.c.l.b16 %v652
    %v692 = vunpack.c.l.b16 %v653
    %v693 = vunpack.c.l.b16 %v654
    %v694 = vunpack.c.l.b16 %v655
    %v695 = vunpack.c.l.b16 %v656
    %v696 = vunpack.c.l.b16 %v657
    %v697 = vunpack.c.l.b16 %v658
    %v698 = vunpack.c.l.b16 %v659
    %v699 = vunpack.c.l.b16 %v660
    %v700 = vunpack.c.l.b16 %v661
    %v701 = vunpack.c.l.b16 %v662
    %v702 = vunpack.c.l.b16 %v663
    %v703 = vunpack.c.l.b16 %v664
    %v704 = vunpack.c.l.b16 %v665
    %v705 = vpack.c.b16 %v690, %v689
    %v706 = vpack.c.b16 %v692, %v691
    %v707 = vpack.c.b16 %v694, %v693
    %v708 = vpack.c.b16 %v696, %v695
    %v709 = vpack.c.b16 %v698, %v697
    %v710 = vpack.c.b16 %v700, %v699
    %v711 = vpack.c.b16 %v702, %v701
    %v712 = vpack.c.b16 %v704, %v703
    %721 = vmatprep.subr.bf16.mxu0 0
    %722 = vmatpush1.bf16.msra.mxu0 %v712
    %723 = vmatprep.subr.bf16.mxu0 0
    %724 = vmatpush1.bf16.msra.mxu0 %v711
    %725 = vmatprep.subr.bf16.mxu0 0
    %726 = vmatpush1.bf16.msra.mxu0 %v710
    %727 = vmatprep.subr.bf16.mxu0 0
    %728 = vmatpush1.bf16.msra.mxu0 %v709
    %729 = vmatprep.subr.bf16.mxu0 0
    %730 = vmatpush1.bf16.msra.mxu0 %v708
    %731 = vmatprep.subr.bf16.mxu0 0
    %732 = vmatpush1.bf16.msra.mxu0 %v707
    %733 = vmatprep.subr.bf16.mxu0 0
    %734 = vmatpush1.bf16.msra.mxu0 %v706
    %735 = vmatprep.subr.bf16.mxu0 0
    %736 = vmatpush1.bf16.msra.mxu0 %v705
    %737 = vmatprep.subr.bf16.mxu0 0
    %738 = vmatpush2.bf16.msra.mxu0 0
    %739 = vmatprep.subr.bf16.mxu0 0
    %740 = vmatpush2.bf16.msra.mxu0 0
    %741 = vmatprep.subr.bf16.mxu0 0
    %742 = vmatpush2.bf16.msra.mxu0 0
    %743 = vmatprep.subr.bf16.mxu0 0
    %744 = vmatpush2.bf16.msra.mxu0 0
    %745 = vmatprep.subr.bf16.mxu0 0
    %746 = vmatpush2.bf16.msra.mxu0 0
    %747 = vmatprep.subr.bf16.mxu0 0
    %748 = vmatpush2.bf16.msra.mxu0 0
    %749 = vmatprep.subr.bf16.mxu0 0
    %750 = vmatpush2.bf16.msra.mxu0 0
    %751 = vmatprep.subr.bf16.mxu0 0
    %752 = vmatpush2.bf16.msra.mxu0 0
    %753 = vmatprep.mubr.bf16.mxu0 0
    %754 = vmatmul.mubr.bf16.gmra.mxu0 %v649
    %v755 = vpop.f32.mrf.mxu0
    %v756 = vadd.f32 %v671, %v755
    %v757 = vpop.f32.mrf.mxu0
    %v758 = vpop.f32.mrf.mxu0
    %v759 = vpop.f32.mrf.mxu0
    %760 = vdwg.mxu0
    %761 = vst [vmem:[#allocation16] sm:$0xff] %v756
    // Predicated region
    $region74: #{tpu_custom_call.1} parent=1 // pred_check
      _
    $region75: #{tpu_custom_call.1} parent=1 // pred_check_branch
      %763 = sbr.rel (0) target = $region77
    $region76: #{tpu_custom_call.1} parent=1 // pred_region
      %s765 = ssub.s32 128, 128
      %766 = vsyncadd [#allocation4], %s765
      %s768 = sshll.u32 [#allocation16], 4
      %s769 = int_to_ptr.vmem [resolvable:$true] %s768
      %771 = dma.vmem_to_hbm [thread:$0]  %s769, 128, %s10, [#allocation4]
    $region77: #{tpu_custom_call.1} parent=1 // pred_fallthru
      _
    // Predicated region
    $region78: #{tpu_custom_call.1} parent=1 // pred_check
      _
    $region79: #{tpu_custom_call.1} parent=1 // pred_check_branch
      %773 = sbr.rel (0) target = $region81
    $region80: #{tpu_custom_call.1} parent=1 // pred_region
      %s775 = ssub.s32 128, 128
      %776 = vsyncadd [#allocation18], %s775
      %s778 = sshll.u32 [#allocation17], 4
      %s779 = int_to_ptr.vmem [resolvable:$true] %s778
      %781 = dma.vmem_to_hbm [thread:$0]  %s779, 128, %s11, [#allocation18]
    $region81: #{tpu_custom_call.1} parent=1 // pred_fallthru
      _
    // Predicated region
    $region82: #{tpu_custom_call.1} parent=1 // pred_check
      _
    $region83: #{tpu_custom_call.1} parent=1 // pred_check_branch
      %783 = sbr.rel (0) target = $region85
    $region84: #{tpu_custom_call.1} parent=1 // pred_region
      %784 = dma.done [#allocation4], 128
    $region85: #{tpu_custom_call.1} parent=1 // pred_fallthru
      _
    // Predicated region
    $region86: #{tpu_custom_call.1} parent=1 // pred_check
      _
    $region87: #{tpu_custom_call.1} parent=1 // pred_check_branch
      %786 = sbr.rel (0) target = $region89
    $region88: #{tpu_custom_call.1} parent=1 // pred_region
      %787 = dma.done [#allocation18], 128
    $region89: #{tpu_custom_call.1} parent=1 // pred_fallthru
      _
    %788 = vsyncpa [#allocation3], 1
    %789 = vsyncpa [#allocation6], 1
    %790 = vsyncpa [#allocation9], 1
    %791 = vsyncpa [#allocation12], 1
    %792 = vsyncpa [#allocation15], 1
    %793 = vsyncpa [#allocation4], 1
    %794 = vsyncpa [#allocation18], 1

</llo_original>
